<compile_context>
chip_gen: v7x
topology: tpu7x:2x2x1
jax: 0.10.0
libtpu: 0.0.40
codegen_flags: <defaults>
</compile_context>

<pallas_src>
import jax
import jax.numpy as jnp
from jax.experimental import pallas as pl
from jax.experimental.pallas import tpu as pltpu


def _copy_kernel(x_ref, o_ref):
    # Pure data movement: one VMEM tile in, same tile out.
    o_ref[...] = x_ref[...]


def _lane_dense_2d(total):
    """Factor `total` into (rows, lanes) with lanes a multiple of 128 if possible."""
    if total % 128 == 0:
        lanes = 128
        # Widen the lane dim (wider unmasked stores) up to 1024 while it divides.
        while lanes < 1024 and total % (lanes * 2) == 0:
            lanes *= 2
        return total // lanes, lanes
    # Fallback: single full-extent row; block == full array, so the (8,128)
    # divisibility constraint does not apply.
    return 1, total


def _row_tile(rows):
    """Row tile: full extent when small, else 512 rows (multiple of 8, ~85% of
    HBM roofline per the measured tile-size sweep; 512x1024xf32 block = 2 MiB,
    x2 (in+out) x2 (double buffer) = 8 MiB, fits every generation's VMEM)."""
    return rows if rows <= 512 else 512


def squeeze_pallas(x, dim):
    """Pallas equivalent of torch.squeeze(x, dim)."""
    d = dim % x.ndim                    # support negative dims like torch
    if x.shape[d] != 1:
        return x                        # torch semantics: no-op if size != 1

    out_shape = x.shape[:d] + x.shape[d + 1:]
    total = x.size
    if total == 0:
        return jnp.reshape(x, out_shape)

    rows, lanes = _lane_dense_2d(total)
    x2 = jnp.reshape(x, (rows, lanes))  # layout plumbing outside the kernel
    tm = _row_tile(rows)
    grid = (pl.cdiv(rows, tm),)

    y2 = pl.pallas_call(
        _copy_kernel,
        out_shape=jax.ShapeDtypeStruct((rows, lanes), x.dtype),
        grid=grid,
        in_specs=[pl.BlockSpec((tm, lanes), lambda i: (i, 0))],
        out_specs=pl.BlockSpec((tm, lanes), lambda i: (i, 0)),
        compiler_params=pltpu.CompilerParams(
            # Row axis is embarrassingly parallel -> lets v7x shard across its
            # two TensorCores; neutral on single-TC v5e/v6e.
            dimension_semantics=("parallel",),
            # Headroom beyond the 32 MiB scoped default, still safe on v7x's
            # 64 MiB physical VMEM (actual usage here is only a few MiB).
            vmem_limit_bytes=48 * 1024 * 1024,
        ),
        cost_estimate=pl.CostEstimate(
            flops=0,
            transcendentals=0,
            bytes_accessed=2 * total * x.dtype.itemsize,
        ),
    )(x2)
    return jnp.reshape(y2, out_shape)


class SqueezePallas:
    """Mirror of robomimic Squeeze module (forward = x.squeeze(dim))."""

    def __init__(self, dim):
        self.dim = dim

    def output_shape(self, input_shape=None):
        assert input_shape is not None
        if input_shape[self.dim] == 1:
            return list(input_shape[: self.dim]) + list(input_shape[self.dim + 1:])
        return list(input_shape)

    def __call__(self, x):
        return squeeze_pallas(x, self.dim)


if __name__ == "__main__":
    # Small shapes consistent with the module: batch=2, a size-1 channel dim to
    # squeeze (dim=1), 16x16 spatial.
    key = jax.random.PRNGKey(0)
    x = jax.random.normal(key, (2, 1, 16, 16), jnp.float32)

    mod = SqueezePallas(dim=1)
    out = jax.block_until_ready(mod(x))

    ref = jnp.squeeze(x, axis=1)
    assert out.shape == (2, 16, 16), out.shape
    assert out.dtype == x.dtype
    assert jnp.array_equal(out, ref), "mismatch vs jnp.squeeze reference"

    # Identity path (dim whose size != 1) must be a no-op, like torch.squeeze.
    out_id = jax.block_until_ready(SqueezePallas(dim=0)(x))
    assert out_id.shape == x.shape
    assert jnp.array_equal(out_id, x)

    print("KERNEL_OK")
</pallas_src>

<mosaic_0001>
module attributes {stable_mosaic.version = 11 : i64} {
  func.func @_copy_kernel(%arg0: i32, %arg1: memref<1x512xf32, #tpu.memory_space<vmem>>, %arg2: memref<1x512xf32, #tpu.memory_space<vmem>>) attributes {dimension_semantics = [#tpu.dimension_semantics<parallel>], iteration_bounds = array<i64: 1>, scalar_prefetch = 0 : i64, scratch_operands = 0 : i64, tpu.core_type = #tpu.core_type<tc>, window_params = [{transform_indices = @transform_0, window_bounds = array<i64: 1, 512>}, {transform_indices = @transform_1, window_bounds = array<i64: 1, 512>}]} {
    %c0 = arith.constant 0 : index
    %c0_0 = arith.constant 0 : index
    %0 = vector.load %arg1[%c0, %c0_0] : memref<1x512xf32, #tpu.memory_space<vmem>>, vector<1x512xf32>
    %c0_1 = arith.constant 0 : index
    %c0_2 = arith.constant 0 : index
    %1 = vector.load %arg2[%c0_1, %c0_2] : memref<1x512xf32, #tpu.memory_space<vmem>>, vector<1x512xf32>
    tpu.vector_store %arg2[%c0_1, %c0_2], %0 {strides = array<i32>} : memref<1x512xf32, #tpu.memory_space<vmem>>, vector<1x512xf32>,
    return
  }
  func.func @transform_0(%arg0: i32) -> (i32, i32) {
    %c0_i32 = arith.constant 0 : i32
    %c0_i32_0 = arith.constant 0 : i32
    return %arg0, %c0_i32 : i32, i32
  }
  func.func @transform_1(%arg0: i32) -> (i32, i32) {
    %c0_i32 = arith.constant 0 : i32
    %c0_i32_0 = arith.constant 0 : i32
    return %arg0, %c0_i32 : i32, i32
  }
}

</mosaic_0001>

<llo_original>
// kernel: tpu_custom_call.1
$region0: #{tpu_custom_call.1}
  #allocation0 [shape = 'u32[]', space=smem, size = 0x4, offset = 0x4, fixed_abs, tag = 'smem constant byte address 0x4 - core index']
  #allocation1 [shape = 'u32[144,128]{1,0:T(1,128)}', space=vmem, size = 0x12000, scoped, tag = 'internal scratch']
  %s0 = inlined_call_operand.hbm [shape: f32[1,512], index: 0, kind: input, shape index: {}]
  %s1 = inlined_call_operand.hbm [shape: f32[1,512], index: 1, kind: output, shape index: {}]
  %s2 = sld [smem:[#allocation0]]
  $region18: #{tpu_custom_call.1} parent=0
    _
  %s4 = ssub.s32 1, %s2
  %s5 = scalar_select 0, %s4, %s2
  $region1: #{tpu_custom_call.1} parent=0
    #allocation2 [shape = 'u8[2048]{0}', space=vmem, size = 0x800, scoped, tag = 'input window, operand 0, single buffered']
    #allocation3 [shape = 's32[1]{0}', space=sflag, size = 0x4, scoped, tag = 'scoped memory for tpu_custom_call.1']
    #allocation4 [shape = 's32[1]{0}', space=sflag, size = 0x4, scoped, tag = 'scoped memory for tpu_custom_call.1']
    #allocation5 [shape = 'u8[2048]{0}', space=vmem, size = 0x800, scoped, tag = 'output window, operand 0, single buffered']
    %6 = vsyncpa [#allocation3], 0
    %7 = vsyncpa [#allocation4], 0
    // Predicated region
    $region2: #{tpu_custom_call.1} parent=1 // pred_check
      _
    $region3: #{tpu_custom_call.1} parent=1 // pred_check_branch
      %9 = sbr.rel (0) target = $region5
    $region4: #{tpu_custom_call.1} parent=1 // pred_region
      %s11 = ssub.s32 64, 64
      %12 = vsyncadd [#allocation3], %s11
      %s14 = sshll.u32 [#allocation2], 4
      %s15 = int_to_ptr.vmem [resolvable:$true] %s14
      %17 = dma.hbm_to_vmem [thread:$0]  %s0, 64, %s15, [#allocation3]
    $region5: #{tpu_custom_call.1} parent=1 // pred_fallthru
      _
    // Predicated region
    $region6: #{tpu_custom_call.1} parent=1 // pred_check
      _
    $region7: #{tpu_custom_call.1} parent=1 // pred_check_branch
      %19 = sbr.rel (0) target = $region9
    $region8: #{tpu_custom_call.1} parent=1 // pred_region
      %20 = dma.done [#allocation3], 64
    $region9: #{tpu_custom_call.1} parent=1 // pred_fallthru
      _
    %v21 = vld [vmem:[#allocation2] sm:$0xf]
    %v22 = vlaneseq
    %vm23 = vcmp.ge.s32.totalorder %v22, 0
    %vm24 = vcmp.lt.s32.totalorder %v22, 512
    %vm25 = vmand %vm23, %vm24
    %26 = vst.msk [vmem:[#allocation5] sm:$0xf] %vm25, %v21
    // Predicated region
    $region10: #{tpu_custom_call.1} parent=1 // pred_check
      _
    $region11: #{tpu_custom_call.1} parent=1 // pred_check_branch
      %28 = sbr.rel (0) target = $region13
    $region12: #{tpu_custom_call.1} parent=1 // pred_region
      %s30 = ssub.s32 64, 64
      %31 = vsyncadd [#allocation4], %s30
      %s33 = sshll.u32 [#allocation5], 4
      %s34 = int_to_ptr.vmem [resolvable:$true] %s33
      %36 = dma.vmem_to_hbm [thread:$0]  %s34, 64, %s1, [#allocation4]
    $region13: #{tpu_custom_call.1} parent=1 // pred_fallthru
      _
    // Predicated region
    $region14: #{tpu_custom_call.1} parent=1 // pred_check
      _
    $region15: #{tpu_custom_call.1} parent=1 // pred_check_branch
      %38 = sbr.rel (0) target = $region17
    $region16: #{tpu_custom_call.1} parent=1 // pred_region
      %39 = dma.done [#allocation4], 64
    $region17: #{tpu_custom_call.1} parent=1 // pred_fallthru
      _
    %40 = vsyncpa [#allocation3], 1
    %41 = vsyncpa [#allocation4], 1

</llo_original>
